<compile_context>
chip_gen: v7x
topology: tpu7x:2x2x1
jax: 0.10.0
libtpu: 0.0.40
codegen_flags: <defaults>
</compile_context>

<pallas_src>
import jax
import jax.numpy as jnp
from jax.experimental import pallas as pl
from jax.experimental.pallas import tpu as pltpu

LANES = 128
SUBLANES = 8
MAX_TILE_BYTES = 2 * 1024 * 1024      # ~2 MiB per input block per grid step
NUM_SPLITS = 2                        # leading "parallel" axis (v7x: 2 TCs)
SMALL_FAST_PATH_ELEMS = 1 << 20       # below this, fused XLA is cheaper


def _dice_partial_kernel(p_ref, g_ref, o_ref):
    """Accumulate per-split partial sums of P*G and P+G.

    o_ref block: (1, 2, 8, 128) f32. Its block index only depends on the
    leading (parallel) grid axis, so it stays resident in VMEM across the
    inner (arbitrary) reduction axis and acts as two vreg-sized accumulators.
    NOTE: this relies on the output block never being revisited/rotated —
    do not change out_specs without revisiting this accumulation scheme.
    """
    i = pl.program_id(1)

    @pl.when(i == 0)
    def _():
        o_ref[...] = jnp.zeros_like(o_ref)

    p = p_ref[...].astype(jnp.float32)
    g = g_ref[...].astype(jnp.float32)

    rows = p.shape[0]  # static; always a multiple of 8 (wrapper guarantees it)
    # Reduce each per-step tile down to one (8,128) vreg (pure VPU vreg adds
    # over the leading axis) before touching the accumulators.
    prod = (p * g).reshape(rows // SUBLANES, SUBLANES, LANES).sum(axis=0)
    both = (p + g).reshape(rows // SUBLANES, SUBLANES, LANES).sum(axis=0)
    o_ref[0, 0, :, :] += prod
    o_ref[0, 1, :, :] += both


def _dice_from_sums(inter, union):
    return 1.0 - (2.0 * inter + 1.0) / (union + 1.0)


def custom_loss(y_pred: jax.Array, y_true: jax.Array, *,
                force_pallas: bool = False) -> jax.Array:
    """Dice loss over all elements of y_pred / y_true (CustomLoss.forward)."""
    assert y_pred.shape == y_true.shape

    p_flat = y_pred.reshape(-1)
    g_flat = y_true.reshape(-1)
    n = p_flat.shape[0]

    if not force_pallas and n < SMALL_FAST_PATH_ELEMS:
        # Small-input fast path: launch overhead dominates; let XLA fuse it.
        p32 = p_flat.astype(jnp.float32)
        g32 = g_flat.astype(jnp.float32)
        return _dice_from_sums(jnp.sum(p32 * g32), jnp.sum(p32) + jnp.sum(g32))

    # --- tiling ------------------------------------------------------------
    itemsize = max(p_flat.dtype.itemsize, g_flat.dtype.itemsize)
    tile_cap = max(
        SUBLANES,
        (MAX_TILE_BYTES // (LANES * itemsize)) // SUBLANES * SUBLANES,
    )

    # Rows after padding n up to a whole number of (8,128) vregs.
    rows = pl.cdiv(n, SUBLANES * LANES) * SUBLANES

    if rows <= tile_cap:
        tile_rows, num_splits, steps = rows, 1, 1
    else:
        tile_rows = tile_cap
        num_blocks = pl.cdiv(rows, tile_rows)
        # Split across TensorCores only when the padding waste stays small.
        num_splits = NUM_SPLITS if num_blocks >= 2 * NUM_SPLITS else 1
        steps = pl.cdiv(num_blocks, num_splits)
        rows = num_splits * steps * tile_rows   # whole number of blocks

    # Zero padding is sum-safe for sum(P*G), sum(P), sum(G) -> no in-kernel
    # tail masking on any step.
    pad = rows * LANES - n
    if pad:
        p_flat = jnp.pad(p_flat, (0, pad))
        g_flat = jnp.pad(g_flat, (0, pad))
    p2d = p_flat.reshape(rows, LANES)
    g2d = g_flat.reshape(rows, LANES)

    in_map = lambda c, i: (c * steps + i, 0)

    partials = pl.pallas_call(
        _dice_partial_kernel,
        out_shape=jax.ShapeDtypeStruct(
            (num_splits, 2, SUBLANES, LANES), jnp.float32),
        grid_spec=pltpu.PrefetchScalarGridSpec(
            num_scalar_prefetch=0,
            grid=(num_splits, steps),
            in_specs=[
                pl.BlockSpec((tile_rows, LANES), in_map),
                pl.BlockSpec((tile_rows, LANES), in_map),
            ],
            out_specs=pl.BlockSpec((1, 2, SUBLANES, LANES),
                                   lambda c, i: (c, 0, 0, 0)),
        ),
        compiler_params=pltpu.CompilerParams(
            dimension_semantics=("parallel", "arbitrary"),
            vmem_limit_bytes=32 * 1024 * 1024,
        ),
    )(p2d, g2d)

    # Single cross-lane/sublane reduction + dice formula in the wrapper.
    inter = jnp.sum(partials[:, 0])
    union = jnp.sum(partials[:, 1])
    return _dice_from_sums(inter, union)


if __name__ == "__main__":
    def _ref_loss(p, g):
        p = p.astype(jnp.float32)
        g = g.astype(jnp.float32)
        return _dice_from_sums(jnp.sum(p * g), jnp.sum(p) + jnp.sum(g))

    key = jax.random.PRNGKey(0)
    kp, kg = jax.random.split(key)

    # Small NCHW-like shapes consistent with a segmentation loss.
    y_pred = jax.random.uniform(kp, (2, 4, 16, 16), dtype=jnp.float32)
    y_true = (jax.random.uniform(kg, (2, 4, 16, 16)) > 0.5).astype(jnp.float32)

    loss = custom_loss(y_pred, y_true, force_pallas=True)
    jax.block_until_ready(loss)
    ref = _ref_loss(y_pred, y_true)
    assert jnp.allclose(loss, ref, rtol=1e-5, atol=1e-6), (loss, ref)

    # Larger check exercising the multi-block streaming path and the 2-way
    # "parallel" split (4 blocks of 4096 f32 rows).
    kp2, kg2 = jax.random.split(jax.random.PRNGKey(1))
    big_pred = jax.random.uniform(kp2, (4, 4, 256, 512), dtype=jnp.float32)
    big_true = (jax.random.uniform(kg2, (4, 4, 256, 512)) > 0.5).astype(
        jnp.float32)
    big_loss = custom_loss(big_pred, big_true)
    jax.block_until_ready(big_loss)
    big_ref = _ref_loss(big_pred, big_true)
    assert jnp.allclose(big_loss, big_ref, rtol=1e-4, atol=1e-5), (
        big_loss, big_ref)

    print("KERNEL_OK")
</pallas_src>

<mosaic_0001>
module attributes {stable_mosaic.version = 11 : i64} {
  func.func @_dice_partial_kernel(%arg0: i32, %arg1: i32, %arg2: memref<16x128xf32, #tpu.memory_space<vmem>>, %arg3: memref<16x128xf32, #tpu.memory_space<vmem>>, %arg4: memref<1x2x8x128xf32, #tpu.memory_space<vmem>>) attributes {dimension_semantics = [#tpu.dimension_semantics<parallel>, #tpu.dimension_semantics<arbitrary>], iteration_bounds = array<i64: 1, 1>, scalar_prefetch = 0 : i64, scratch_operands = 0 : i64, tpu.core_type = #tpu.core_type<tc>, window_params = [{transform_indices = @transform_0, window_bounds = array<i64: 16, 128>}, {transform_indices = @transform_1, window_bounds = array<i64: 16, 128>}, {transform_indices = @transform_2, window_bounds = array<i64: 1, 2, 8, 128>}]} {
    %c0_i32 = arith.constant 0 : i32
    %0 = arith.cmpi eq, %arg1, %c0_i32 : i32
    %1 = arith.extui %0 : i1 to i32
    %c0_i32_0 = arith.constant 0 : i32
    %2 = arith.cmpi ne, %1, %c0_i32_0 : i32
    scf.if %2 {
      %cst_20 = arith.constant 0.000000e+00 : f32
      %23 = vector.broadcast %cst_20 : f32 to vector<1x2x8x128xf32>
      %c0_21 = arith.constant 0 : index
      %c0_22 = arith.constant 0 : index
      %c0_23 = arith.constant 0 : index
      %c0_24 = arith.constant 0 : index
      %24 = vector.load %arg4[%c0_21, %c0_22, %c0_23, %c0_24] : memref<1x2x8x128xf32, #tpu.memory_space<vmem>>, vector<1x2x8x128xf32>
      tpu.vector_store %arg4[%c0_21, %c0_22, %c0_23, %c0_24], %23 {strides = array<i32>} : memref<1x2x8x128xf32, #tpu.memory_space<vmem>>, vector<1x2x8x128xf32>,
    } else {
    }
    %c0 = arith.constant 0 : index
    %c0_1 = arith.constant 0 : index
    %3 = vector.load %arg2[%c0, %c0_1] : memref<16x128xf32, #tpu.memory_space<vmem>>, vector<16x128xf32>
    %c0_2 = arith.constant 0 : index
    %c0_3 = arith.constant 0 : index
    %4 = vector.load %arg3[%c0_2, %c0_3] : memref<16x128xf32, #tpu.memory_space<vmem>>, vector<16x128xf32>
    %5 = arith.mulf %3, %4 : vector<16x128xf32>
    %6 = vector.shape_cast %5 : vector<16x128xf32> to vector<2x8x128xf32>
    %cst = arith.constant dense<0.000000e+00> : vector<8x128xf32>
    %7 = vector.multi_reduction <add>, %6, %cst [0] : vector<2x8x128xf32> to vector<8x128xf32>
    %8 = arith.addf %3, %4 : vector<16x128xf32>
    %9 = vector.shape_cast %8 : vector<16x128xf32> to vector<2x8x128xf32>
    %cst_4 = arith.constant dense<0.000000e+00> : vector<8x128xf32>
    %10 = vector.multi_reduction <add>, %9, %cst_4 [0] : vector<2x8x128xf32> to vector<8x128xf32>
    %c0_5 = arith.constant 0 : index
    %c0_6 = arith.constant 0 : index
    %c0_7 = arith.constant 0 : index
    %c0_8 = arith.constant 0 : index
    %11 = vector.load %arg4[%c0_5, %c0_6, %c0_7, %c0_8] : memref<1x2x8x128xf32, #tpu.memory_space<vmem>>, vector<1x1x8x128xf32>
    %12 = vector.shape_cast %11 : vector<1x1x8x128xf32> to vector<8x128xf32>
    %13 = arith.addf %12, %7 : vector<8x128xf32>
    %c0_9 = arith.constant 0 : index
    %c0_10 = arith.constant 0 : index
    %c0_11 = arith.constant 0 : index
    %c0_12 = arith.constant 0 : index
    %14 = vector.load %arg4[%c0_9, %c0_10, %c0_11, %c0_12] : memref<1x2x8x128xf32, #tpu.memory_space<vmem>>, vector<1x1x8x128xf32>
    %15 = vector.shape_cast %14 : vector<1x1x8x128xf32> to vector<8x128xf32>
    %16 = vector.shape_cast %13 : vector<8x128xf32> to vector<1x1x8x128xf32>
    tpu.vector_store %arg4[%c0_9, %c0_10, %c0_11, %c0_12], %16 {strides = array<i32>} : memref<1x2x8x128xf32, #tpu.memory_space<vmem>>, vector<1x1x8x128xf32>,
    %c0_13 = arith.constant 0 : index
    %c1 = arith.constant 1 : index
    %c0_14 = arith.constant 0 : index
    %c0_15 = arith.constant 0 : index
    %17 = vector.load %arg4[%c0_13, %c1, %c0_14, %c0_15] : memref<1x2x8x128xf32, #tpu.memory_space<vmem>>, vector<1x1x8x128xf32>
    %18 = vector.shape_cast %17 : vector<1x1x8x128xf32> to vector<8x128xf32>
    %19 = arith.addf %18, %10 : vector<8x128xf32>
    %c0_16 = arith.constant 0 : index
    %c1_17 = arith.constant 1 : index
    %c0_18 = arith.constant 0 : index
    %c0_19 = arith.constant 0 : index
    %20 = vector.load %arg4[%c0_16, %c1_17, %c0_18, %c0_19] : memref<1x2x8x128xf32, #tpu.memory_space<vmem>>, vector<1x1x8x128xf32>
    %21 = vector.shape_cast %20 : vector<1x1x8x128xf32> to vector<8x128xf32>
    %22 = vector.shape_cast %19 : vector<8x128xf32> to vector<1x1x8x128xf32>
    tpu.vector_store %arg4[%c0_16, %c1_17, %c0_18, %c0_19], %22 {strides = array<i32>} : memref<1x2x8x128xf32, #tpu.memory_space<vmem>>, vector<1x1x8x128xf32>,
    return
  }
  func.func @transform_0(%arg0: i32, %arg1: i32) -> (i32, i32) {
    %c1_i32 = arith.constant 1 : i32
    %0 = arith.muli %arg0, %c1_i32 : i32
    %1 = arith.addi %0, %arg1 : i32
    %c0_i32 = arith.constant 0 : i32
    %c0_i32_0 = arith.constant 0 : i32
    return %1, %c0_i32 : i32, i32
  }
  func.func @transform_1(%arg0: i32, %arg1: i32) -> (i32, i32) {
    %c1_i32 = arith.constant 1 : i32
    %0 = arith.muli %arg0, %c1_i32 : i32
    %1 = arith.addi %0, %arg1 : i32
    %c0_i32 = arith.constant 0 : i32
    %c0_i32_0 = arith.constant 0 : i32
    return %1, %c0_i32 : i32, i32
  }
  func.func @transform_2(%arg0: i32, %arg1: i32) -> (i32, i32, i32, i32) {
    %c0_i32 = arith.constant 0 : i32
    %c0_i32_0 = arith.constant 0 : i32
    %c0_i32_1 = arith.constant 0 : i32
    %c0_i32_2 = arith.constant 0 : i32
    return %arg0, %c0_i32, %c0_i32_0, %c0_i32_1 : i32, i32, i32, i32
  }
}

</mosaic_0001>

<llo_original>
// kernel: tpu_custom_call.1
$region0: #{tpu_custom_call.1}
  #allocation0 [shape = 'u32[]', space=smem, size = 0x4, offset = 0x4, fixed_abs, tag = 'smem constant byte address 0x4 - core index']
  #allocation1 [shape = 'u32[144,128]{1,0:T(1,128)}', space=vmem, size = 0x12000, scoped, tag = 'internal scratch']
  %s0 = inlined_call_operand.hbm [shape: f32[16,128], index: 0, kind: input, shape index: {}]
  %s1 = inlined_call_operand.hbm [shape: f32[16,128], index: 1, kind: input, shape index: {}]
  %s2 = inlined_call_operand.hbm [shape: f32[1,2,8,128], index: 2, kind: output, shape index: {}]
  %s3 = sld [smem:[#allocation0]]
  $region30: #{tpu_custom_call.1} parent=0
    _
  %s5 = ssub.s32 1, %s3
  %s6 = scalar_select 0, %s5, %s3
  $region1: #{tpu_custom_call.1} parent=0
    #allocation2 [shape = 'u8[8192]{0}', space=vmem, size = 0x2000, scoped, tag = 'input window, operand 0, single buffered']
    #allocation3 [shape = 's32[1]{0}', space=sflag, size = 0x4, scoped, tag = 'scoped memory for tpu_custom_call.1']
    #allocation4 [shape = 's32[1]{0}', space=sflag, size = 0x4, scoped, tag = 'scoped memory for tpu_custom_call.1']
    #allocation5 [shape = 'u8[8192]{0}', space=vmem, size = 0x2000, scoped, tag = 'input window, operand 1, single buffered']
    #allocation6 [shape = 's32[1]{0}', space=sflag, size = 0x4, scoped, tag = 'scoped memory for tpu_custom_call.1']
    #allocation7 [shape = 'u8[8192]{0}', space=vmem, size = 0x2000, scoped, tag = 'output window, operand 0, single buffered']
    %7 = vsyncpa [#allocation3], 0
    %8 = vsyncpa [#allocation6], 0
    %9 = vsyncpa [#allocation4], 0
    // Predicated region
    $region2: #{tpu_custom_call.1} parent=1 // pred_check
      _
    $region3: #{tpu_custom_call.1} parent=1 // pred_check_branch
      %11 = sbr.rel (0) target = $region5
    $region4: #{tpu_custom_call.1} parent=1 // pred_region
      %s12 = sadd.s32 0, 0
      %s13 = smul.u32 2, %s12
      %s15 = ssub.s32 256, 256
      %16 = vsyncadd [#allocation3], %s15
      %s17 = smul.addr %s13, 128
      %s18 = scalar_lea.hbm %s0, %s17
      %s19 = sshll.u32 [#allocation2], 4
      %s20 = int_to_ptr.vmem [resolvable:$true] %s19
      %25 = dma.hbm_to_vmem [thread:$0]  %s18, 256, %s20, [#allocation3], 128, 128, 8
    $region5: #{tpu_custom_call.1} parent=1 // pred_fallthru
      _
    // Predicated region
    $region6: #{tpu_custom_call.1} parent=1 // pred_check
      _
    $region7: #{tpu_custom_call.1} parent=1 // pred_check_branch
      %27 = sbr.rel (0) target = $region9
    $region8: #{tpu_custom_call.1} parent=1 // pred_region
      %s28 = sadd.s32 0, 0
      %s29 = smul.u32 2, %s28
      %s31 = ssub.s32 256, 256
      %32 = vsyncadd [#allocation6], %s31
      %s33 = smul.addr %s29, 128
      %s34 = scalar_lea.hbm %s1, %s33
      %s35 = sshll.u32 [#allocation5], 4
      %s36 = int_to_ptr.vmem [resolvable:$true] %s35
      %41 = dma.hbm_to_vmem [thread:$0]  %s34, 256, %s36, [#allocation6], 128, 128, 8
    $region9: #{tpu_custom_call.1} parent=1 // pred_fallthru
      _
    // Predicated region
    $region10: #{tpu_custom_call.1} parent=1 // pred_check
      _
    $region11: #{tpu_custom_call.1} parent=1 // pred_check_branch
      %43 = sbr.rel (0) target = $region13
    $region12: #{tpu_custom_call.1} parent=1 // pred_region
      %44 = dma.done [#allocation3], 256
    $region13: #{tpu_custom_call.1} parent=1 // pred_fallthru
      _
    // Predicated region
    $region14: #{tpu_custom_call.1} parent=1 // pred_check
      _
    $region15: #{tpu_custom_call.1} parent=1 // pred_check_branch
      %46 = sbr.rel (0) target = $region17
    $region16: #{tpu_custom_call.1} parent=1 // pred_region
      %47 = dma.done [#allocation6], 256
    $region17: #{tpu_custom_call.1} parent=1 // pred_fallthru
      _
    %s48 = sadd.s32 0, 0
    %s49 = smul.u32 2, %s48
    %s50 = sadd.s32 0, 0
    %s51 = smul.u32 2, %s50
    %p52 = scmp.eq.s32.totalorder 0, 0
    // Predicated region
    $region18: #{tpu_custom_call.1} parent=1 // pred_check
      %p53 = pneg %p52
    $region19: #{tpu_custom_call.1} parent=1 // pred_check_branch
      %55 = sbr.rel (%p53) target = $region21
    $region20: #{tpu_custom_call.1} parent=1 // pred_region
      %56 = vst [vmem:[#allocation7] sm:$0xff] 0.0
      %57 = vst [vmem:[#allocation7 + $0x8] sm:$0xff] 0.0
    $region21: #{tpu_custom_call.1} parent=1 // pred_fallthru
      _
    %v58 = vld [vmem:[#allocation2] sm:$0xff]
    %v59 = vld [vmem:[#allocation2 + $0x8] sm:$0xff]
    %v60 = vld [vmem:[#allocation5] sm:$0xff]
    %v61 = vld [vmem:[#allocation5 + $0x8] sm:$0xff]
    %v62 = vmul.f32 %v58, %v60
    %v63 = vmul.f32 %v59, %v61
    %v64 = vadd.f32 %v62, %v63
    %v65 = vadd.f32 %v58, %v60
    %v66 = vadd.f32 %v59, %v61
    %v67 = vadd.f32 %v65, %v66
    %v68 = vld [vmem:[#allocation7] sm:$0xff]
    %v69 = vadd.f32 %v68, %v64
    %70 = vst [vmem:[#allocation7] sm:$0xff] %v69
    %s71 = scalar_lea.vmem [#allocation7], 8
    %v72 = vld [vmem:[%s71] sm:$0xff]
    %v73 = vadd.f32 %v72, %v67
    %74 = vst [vmem:[%s71] sm:$0xff] %v73
    // Predicated region
    $region22: #{tpu_custom_call.1} parent=1 // pred_check
      _
    $region23: #{tpu_custom_call.1} parent=1 // pred_check_branch
      %76 = sbr.rel (0) target = $region25
    $region24: #{tpu_custom_call.1} parent=1 // pred_region
      %s78 = ssub.s32 256, 256
      %79 = vsyncadd [#allocation4], %s78
      %s80 = sshll.u32 [#allocation7], 4
      %s81 = int_to_ptr.vmem [resolvable:$true] %s80
      %86 = dma.vmem_to_hbm [thread:$0]  %s81, 256, %s2, [#allocation4], 128, 128, 8
    $region25: #{tpu_custom_call.1} parent=1 // pred_fallthru
      _
    // Predicated region
    $region26: #{tpu_custom_call.1} parent=1 // pred_check
      _
    $region27: #{tpu_custom_call.1} parent=1 // pred_check_branch
      %88 = sbr.rel (0) target = $region29
    $region28: #{tpu_custom_call.1} parent=1 // pred_region
      %89 = dma.done [#allocation4], 256
    $region29: #{tpu_custom_call.1} parent=1 // pred_fallthru
      _
    %90 = vsyncpa [#allocation3], 1
    %91 = vsyncpa [#allocation6], 1
    %92 = vsyncpa [#allocation4], 1

</llo_original>
